<compile_context>
chip_gen: v5e
topology: v5e:2x2
jax: 0.10.0
libtpu: 0.0.40
codegen_flags: <defaults>
</compile_context>

<pallas_src>
import math

import jax
import jax.numpy as jnp
from jax.experimental import pallas as pl
from jax.experimental.pallas import tpu as pltpu


# ----------------------------------------------------------------------------
# Parameter (buffer) construction — plain JAX "glue", mirrors nn.Module.__init__
# ----------------------------------------------------------------------------
def make_positional_encoding_buffer(d_model: int, max_len: int = 5000,
                                    dtype=jnp.float32) -> jax.Array:
    if d_model % 2 != 0:
        raise ValueError("d_model must be even (same limitation as the "
                         "PyTorch reference).")
    position = jnp.arange(0, max_len, dtype=jnp.float32)[:, None]          # (L, 1)
    div_term = jnp.exp(
        jnp.arange(0, d_model, 2, dtype=jnp.float32) * (-math.log(10000.0) / d_model)
    )                                                                        # (D/2,)
    pe = jnp.zeros((max_len, d_model), dtype=jnp.float32)
    pe = pe.at[:, 0::2].set(jnp.sin(position * div_term))
    pe = pe.at[:, 1::2].set(jnp.cos(position * div_term))
    # unsqueeze(0).transpose(0, 1)  ->  (max_len, 1, d_model)
    # Built directly in the model dtype so forward never has to convert it.
    return pe[:, None, :].astype(dtype)


# ----------------------------------------------------------------------------
# Pallas kernel: the elementwise hot path  x + pe  (pe broadcast over batch)
# ----------------------------------------------------------------------------
def _pe_add_kernel(x_ref, pe_ref, o_ref):
    # x tile : (tile_s, B, D)
    # pe tile: (tile_s, 1, D)  -> sublane broadcast over the batch axis (VPU)
    o_ref[...] = x_ref[...] + pe_ref[...]


def _default_tile_s(S: int, B: int, D: int, itemsize: int,
                    vmem_budget_bytes: int = 8 << 20,      # safe on v5e/v6e/v7x
                    target_block_bytes: int = 3 << 19,     # ~1.5 MiB real x data
                    min_grid_steps: int = 8) -> int:
    """Pick a sequence tile: multiple of 8, padded-VMEM aware, pipeline-friendly."""
    if S <= 8:
        return S
    lane_pad = pl.cdiv(D, 128) * 128            # lanes round up to 128
    sub_pad_b = pl.cdiv(B, 8) * 8               # (B, D) slab sublanes round up to 8
    # Padded VMEM bytes per sequence row across the whole pipeline:
    #   2 buffers * (x-in slab + out slab)  +  2 buffers * pe (1, D) slab
    bytes_per_row = (4 * sub_pad_b + 2 * 8) * lane_pad * itemsize
    vmem_rows = max(8, vmem_budget_bytes // bytes_per_row)
    target_rows = max(8, target_block_bytes // max(1, B * D * itemsize))
    tile = min(vmem_rows, target_rows)
    # For long sequences, keep >= min_grid_steps grid steps so pipelining (and
    # megacore sharding on v7x) has work to overlap.
    if S >= 8 * min_grid_steps:
        tile = min(tile, pl.cdiv(S, min_grid_steps))
    tile = min(tile, S)
    if tile < S:
        tile = max(8, (tile // 8) * 8)          # keep sublane-aligned tiles
    return tile


def positional_encoding_forward(x: jax.Array, pe: jax.Array,
                                tile_s: int | None = None,
                                donate_x: bool = False) -> jax.Array:
    """x: (seq_len, batch, d_model); pe: (max_len, 1, d_model)."""
    S, B, D = x.shape
    assert pe.ndim == 3 and pe.shape[1] == 1 and pe.shape[2] == D
    assert pe.shape[0] >= S, "max_len must cover the sequence length"
    if pe.dtype != x.dtype:
        # Normally avoided: build the buffer in the model dtype at init.
        pe = pe.astype(x.dtype)

    itemsize = jnp.dtype(x.dtype).itemsize
    if tile_s is None:
        tile_s = _default_tile_s(S, B, D, itemsize)
    grid = (pl.cdiv(S, tile_s),)

    cost = pl.CostEstimate(
        flops=S * B * D,
        transcendentals=0,
        bytes_accessed=(2 * S * B * D + S * D) * itemsize,
    )

    extra_kwargs = {}
    if donate_x:
        # Only useful when the caller donates x; otherwise XLA inserts a copy.
        extra_kwargs["input_output_aliases"] = {0: 0}

    out = pl.pallas_call(
        _pe_add_kernel,
        out_shape=jax.ShapeDtypeStruct((S, B, D), x.dtype),
        grid_spec=pltpu.PrefetchScalarGridSpec(
            num_scalar_prefetch=0,
            grid=grid,
            in_specs=[
                pl.BlockSpec((tile_s, B, D), lambda i: (i, 0, 0)),
                # Full (max_len, 1, D) buffer passed; index_map restricts the
                # DMA to the first ceil(S / tile_s) blocks (== pe[:S]).
                pl.BlockSpec((tile_s, 1, D), lambda i: (i, 0, 0)),
            ],
            out_specs=pl.BlockSpec((tile_s, B, D), lambda i: (i, 0, 0)),
        ),
        compiler_params=pltpu.CompilerParams(
            dimension_semantics=("parallel",)),
        cost_estimate=cost,
        **extra_kwargs,
    )(x, pe)

    # Dropout: eval/inference semantics => identity.
    # TODO(synk): training-mode dropout (stochastic mask + 1/(1-p) scaling) is
    # not reproduced; it is non-deterministic in the reference module.
    return out


# ----------------------------------------------------------------------------
# Demo / correctness check
# ----------------------------------------------------------------------------
if __name__ == "__main__":
    seq_len, batch, d_model = 8, 2, 32
    max_len = 5000  # matches the PyTorch default

    key = jax.random.PRNGKey(0)
    x = jax.random.normal(key, (seq_len, batch, d_model), dtype=jnp.float32)

    pe = make_positional_encoding_buffer(d_model, max_len=max_len,
                                         dtype=x.dtype)

    y = positional_encoding_forward(x, pe)
    y = jax.block_until_ready(y)

    # Pure-JAX reference for the same forward (eval-mode dropout = identity).
    y_ref = x + pe[:seq_len]
    assert y.shape == (seq_len, batch, d_model)
    assert jnp.allclose(y, y_ref, atol=1e-6, rtol=1e-6)

    # Also exercise an explicitly tiled multi-step grid on a longer sequence.
    S2 = 256
    x2 = jax.random.normal(jax.random.PRNGKey(1), (S2, batch, d_model),
                           dtype=jnp.float32)
    y2 = jax.block_until_ready(positional_encoding_forward(x2, pe, tile_s=32))
    assert jnp.allclose(y2, x2 + pe[:S2], atol=1e-6, rtol=1e-6)

    print("KERNEL_OK")
</pallas_src>

<mosaic_0001>
module attributes {stable_mosaic.version = 11 : i64} {
  func.func @_pe_add_kernel(%arg0: i32, %arg1: memref<8x2x32xf32, #tpu.memory_space<vmem>>, %arg2: memref<8x1x32xf32, #tpu.memory_space<vmem>>, %arg3: memref<8x2x32xf32, #tpu.memory_space<vmem>>) attributes {dimension_semantics = [#tpu.dimension_semantics<parallel>], iteration_bounds = array<i64: 1>, scalar_prefetch = 0 : i64, scratch_operands = 0 : i64, tpu.core_type = #tpu.core_type<tc>, window_params = [{transform_indices = @transform_0, window_bounds = array<i64: 8, 2, 32>}, {transform_indices = @transform_1, window_bounds = array<i64: 8, 1, 32>}, {transform_indices = @transform_2, window_bounds = array<i64: 8, 2, 32>}]} {
    %c0 = arith.constant 0 : index
    %c0_0 = arith.constant 0 : index
    %c0_1 = arith.constant 0 : index
    %0 = vector.load %arg1[%c0, %c0_0, %c0_1] : memref<8x2x32xf32, #tpu.memory_space<vmem>>, vector<8x2x32xf32>
    %c0_2 = arith.constant 0 : index
    %c0_3 = arith.constant 0 : index
    %c0_4 = arith.constant 0 : index
    %1 = vector.load %arg2[%c0_2, %c0_3, %c0_4] : memref<8x1x32xf32, #tpu.memory_space<vmem>>, vector<8x1x32xf32>
    %2 = vector.broadcast %1 : vector<8x1x32xf32> to vector<8x2x32xf32>
    %3 = arith.addf %0, %2 : vector<8x2x32xf32>
    %c0_5 = arith.constant 0 : index
    %c0_6 = arith.constant 0 : index
    %c0_7 = arith.constant 0 : index
    %4 = vector.load %arg3[%c0_5, %c0_6, %c0_7] : memref<8x2x32xf32, #tpu.memory_space<vmem>>, vector<8x2x32xf32>
    tpu.vector_store %arg3[%c0_5, %c0_6, %c0_7], %3 {strides = array<i32>} : memref<8x2x32xf32, #tpu.memory_space<vmem>>, vector<8x2x32xf32>,
    return
  }
  func.func @transform_0(%arg0: i32) -> (i32, i32, i32) {
    %c0_i32 = arith.constant 0 : i32
    %c0_i32_0 = arith.constant 0 : i32
    %c0_i32_1 = arith.constant 0 : i32
    return %arg0, %c0_i32, %c0_i32_0 : i32, i32, i32
  }
  func.func @transform_1(%arg0: i32) -> (i32, i32, i32) {
    %c0_i32 = arith.constant 0 : i32
    %c0_i32_0 = arith.constant 0 : i32
    %c0_i32_1 = arith.constant 0 : i32
    return %arg0, %c0_i32, %c0_i32_0 : i32, i32, i32
  }
  func.func @transform_2(%arg0: i32) -> (i32, i32, i32) {
    %c0_i32 = arith.constant 0 : i32
    %c0_i32_0 = arith.constant 0 : i32
    %c0_i32_1 = arith.constant 0 : i32
    return %arg0, %c0_i32, %c0_i32_0 : i32, i32, i32
  }
}

</mosaic_0001>

<llo_original>
// kernel: tpu_custom_call.1
$region0: #{tpu_custom_call.1}
  #allocation0 [shape = 'u32[]', space=smem, size = 0x4, offset = 0x4, fixed_abs, tag = 'smem constant byte address 0x4 - core index']
  #allocation1 [shape = 'u32[72,128]{1,0:T(1,128)}', space=vmem, size = 0x9000, scoped, tag = 'internal scratch']
  %s0 = inlined_call_operand.vmem [shape: f32[8,2,32], index: 0, kind: input, shape index: {}]
  %s1 = inlined_call_operand.vmem [shape: f32[5000,1,32], index: 1, kind: input, shape index: {}]
  %s2 = inlined_call_operand.hbm [shape: f32[8,2,32], index: 2, kind: output, shape index: {}]
  %s3 = sld [smem:[#allocation0]]
  $region18: #{tpu_custom_call.1} parent=0
    _
  %s5 = ssub.s32 1, %s3
  %s6 = scalar_select 0, %s5, %s3
  $region1: #{tpu_custom_call.1} parent=0
    #allocation2 [shape = 'u8[8192]{0}', space=vmem, size = 0x2000, scoped, tag = 'output window, operand 0, single buffered']
    #allocation3 [shape = 's32[1]{0}', space=sflag, size = 0x4, scoped, tag = 'scoped memory for tpu_custom_call.1']
    %7 = vsyncpa [#allocation3], 0
    // Predicated region
    $region2: #{tpu_custom_call.1} parent=1 // pred_check
      _
    $region3: #{tpu_custom_call.1} parent=1 // pred_check_branch
      %9 = sbr.rel (0) target = $region5
    $region4: #{tpu_custom_call.1} parent=1 // pred_region
      _
    $region5: #{tpu_custom_call.1} parent=1 // pred_fallthru
      _
    // Predicated region
    $region6: #{tpu_custom_call.1} parent=1 // pred_check
      _
    $region7: #{tpu_custom_call.1} parent=1 // pred_check_branch
      %11 = sbr.rel (0) target = $region9
    $region8: #{tpu_custom_call.1} parent=1 // pred_region
      _
    $region9: #{tpu_custom_call.1} parent=1 // pred_fallthru
      _
    %v12 = vld [vmem:[%s0] sm:$0x3]
    %v13 = vld [vmem:[%s0 + $0x2] sm:$0x3]
    %v14 = vld [vmem:[%s0 + $0x4] sm:$0x3]
    %v15 = vld [vmem:[%s0 + $0x6] sm:$0x3]
    %v16 = vld [vmem:[%s0 + $0x8] sm:$0x3]
    %v17 = vld [vmem:[%s0 + $0xa] sm:$0x3]
    %v18 = vld [vmem:[%s0 + $0xc] sm:$0x3]
    %v19 = vld [vmem:[%s0 + $0xe] sm:$0x3]
    %v20 = vld [vmem:[%s1] sm:$0x1]
    %v21 = vld [vmem:[%s1 + $0x1] sm:$0x1]
    %v22 = vld [vmem:[%s1 + $0x2] sm:$0x1]
    %v23 = vld [vmem:[%s1 + $0x3] sm:$0x1]
    %v24 = vld [vmem:[%s1 + $0x4] sm:$0x1]
    %v25 = vld [vmem:[%s1 + $0x5] sm:$0x1]
    %v26 = vld [vmem:[%s1 + $0x6] sm:$0x1]
    %v27 = vld [vmem:[%s1 + $0x7] sm:$0x1]
    %v36 = vperm.slane %v20, 0
    %v37 = vperm.slane %v21, 0
    %v38 = vperm.slane %v22, 0
    %v39 = vperm.slane %v23, 0
    %v40 = vperm.slane %v24, 0
    %v41 = vperm.slane %v25, 0
    %v42 = vperm.slane %v26, 0
    %v43 = vperm.slane %v27, 0
    %v52 = vadd.f32 %v12, %v36
    %v53 = vadd.f32 %v13, %v37
    %v54 = vadd.f32 %v14, %v38
    %v55 = vadd.f32 %v15, %v39
    %v56 = vadd.f32 %v16, %v40
    %v57 = vadd.f32 %v17, %v41
    %v58 = vadd.f32 %v18, %v42
    %v59 = vadd.f32 %v19, %v43
    %vm60 = vcmask 254976
    %61 = vst.msk [vmem:[#allocation2] sm:$0x3] %vm60, %v52
    %62 = vst.msk [vmem:[#allocation2 + $0x2] sm:$0x3] %vm60, %v53
    %63 = vst.msk [vmem:[#allocation2 + $0x4] sm:$0x3] %vm60, %v54
    %64 = vst.msk [vmem:[#allocation2 + $0x6] sm:$0x3] %vm60, %v55
    %65 = vst.msk [vmem:[#allocation2 + $0x8] sm:$0x3] %vm60, %v56
    %66 = vst.msk [vmem:[#allocation2 + $0xa] sm:$0x3] %vm60, %v57
    %67 = vst.msk [vmem:[#allocation2 + $0xc] sm:$0x3] %vm60, %v58
    %68 = vst.msk [vmem:[#allocation2 + $0xe] sm:$0x3] %vm60, %v59
    // Predicated region
    $region10: #{tpu_custom_call.1} parent=1 // pred_check
      _
    $region11: #{tpu_custom_call.1} parent=1 // pred_check_branch
      %70 = sbr.rel (0) target = $region13
    $region12: #{tpu_custom_call.1} parent=1 // pred_region
      %72 = vsyncadd [#allocation3], 0
      %s73 = sshll.u32 [#allocation2], 4
      %s74 = int_to_ptr.vmem [resolvable:$true] %s73
      %s75 = sshll.u32 %s2, 4
      %s76 = int_to_ptr.hbm [resolvable:$true] %s75
      %81 = dma.vmem_to_hbm [thread:$0]  %s74, 256, %s76, [#allocation3], 32, 32, 2
    $region13: #{tpu_custom_call.1} parent=1 // pred_fallthru
      _
    // Predicated region
    $region14: #{tpu_custom_call.1} parent=1 // pred_check
      _
    $region15: #{tpu_custom_call.1} parent=1 // pred_check_branch
      %83 = sbr.rel (0) target = $region17
    $region16: #{tpu_custom_call.1} parent=1 // pred_region
      %85 = dma.done [#allocation3], 256
    $region17: #{tpu_custom_call.1} parent=1 // pred_fallthru
      _
    %86 = vsyncpa [#allocation3], 1

</llo_original>
